<compile_context>
chip_gen: v7x
topology: tpu7x:2x2x1
jax: 0.10.0
libtpu: 0.0.40
codegen_flags: <defaults>
</compile_context>

<pallas_src>
import functools

import jax
import jax.numpy as jnp
from jax import lax
from jax.experimental import pallas as pl
from jax.experimental.pallas import tpu as pltpu


# -----------------------------------------------------------------------------
# Kernel 1: softmax (lane-dense) + SSD decode (4, D) + flip + fused TTA concat.
# Grid over batch.  Inputs: loc/loc2 already transposed to (B, 4, D) and dbox to
# (4, D) in the (cheap) JAX wrapper; conf/conf2 stay (B, D, C) and are transposed
# once in-kernel so the big conf tensors never take an extra HBM pass.
# -----------------------------------------------------------------------------
def _preprocess_kernel(loc_ref, loc2_ref, conf_ref, conf2_ref, dbox_ref,
                       scores_ref, boxes_ref, maxs1_ref):
    D = dbox_ref.shape[1]

    def softmax_cd(conf_dc):                       # (D, C) -> (C, D)
        x = jnp.transpose(conf_dc, (1, 0))         # classes on sublanes, D on lanes
        m = jnp.max(x, axis=0, keepdims=True)      # (1, D)
        e = jnp.exp(x - m)                         # lane-dense EUP/VPU work
        s = jnp.sum(e, axis=0, keepdims=True)      # (1, D)
        return e * pl.reciprocal(s, approx=True)   # EUP reciprocal (scores only)

    sm1 = softmax_cd(conf_ref[0])                  # (C, D)
    sm2 = softmax_cd(conf2_ref[0])
    scores_ref[0, :, 0:D] = sm1                    # fused TTA concat (lane-dense)
    scores_ref[0, :, D:2 * D] = sm2
    # per-(b, c) max image-1 score -> "if scores.nelement()==0: continue" mask
    maxs1_ref[0] = jnp.max(sm1, axis=1, keepdims=True)   # (C, 1)

    dbox = dbox_ref[...]                           # (4, D): cx, cy, w, h rows
    d_cxcy = dbox[0:2, :]                          # (2, D)
    d_wh = dbox[2:4, :]                            # (2, D)

    def decode(loc_4d):                            # (4, D) -> (4, D) corner boxes
        cxcy = d_cxcy + loc_4d[0:2, :] * 0.1 * d_wh
        wh = d_wh * jnp.exp(loc_4d[2:4, :] * 0.2)
        mins = cxcy - 0.5 * wh
        maxs = mins + wh
        return jnp.concatenate([mins, maxs], axis=0)   # rows: x1, y1, x2, y2

    b1 = decode(loc_ref[0])
    boxes_ref[0, :, 0:D] = b1

    b2 = decode(loc2_ref[0])
    # Reproduce the reference's in-place aliasing flip:
    #   boxes2[:,0] = 1 - boxes2[:,2]; boxes2[:,2] = 1 - boxes2[:,0]  (alias!)
    nx1 = 1.0 - b2[2:3, :]                         # x1' = 1 - x2
    b2f = jnp.concatenate([nx1, b2[1:2, :], 1.0 - nx1, b2[3:4, :]], axis=0)
    boxes_ref[0, :, D:2 * D] = b2f                 # x2' == old x2 (bug reproduced)


def preprocess_pallas(loc_t, loc2_t, conf, conf2, dbox_t):
    B, _, D = loc_t.shape
    C = conf.shape[2]
    # NOTE: one batch row per grid step keeps per-step VMEM small; for very large
    # D one would add a D-tile grid axis and re-budget against v7x's 64 MiB VMEM.
    return pl.pallas_call(
        _preprocess_kernel,
        out_shape=(jax.ShapeDtypeStruct((B, C, 2 * D), jnp.float32),
                   jax.ShapeDtypeStruct((B, 4, 2 * D), jnp.float32),
                   jax.ShapeDtypeStruct((B, C, 1), jnp.float32)),
        grid_spec=pltpu.PrefetchScalarGridSpec(
            num_scalar_prefetch=0,
            grid=(B,),
            in_specs=[pl.BlockSpec((1, 4, D), lambda b: (b, 0, 0)),
                      pl.BlockSpec((1, 4, D), lambda b: (b, 0, 0)),
                      pl.BlockSpec((1, D, C), lambda b: (b, 0, 0)),
                      pl.BlockSpec((1, D, C), lambda b: (b, 0, 0)),
                      pl.BlockSpec((4, D), lambda b: (0, 0))],
            out_specs=(pl.BlockSpec((1, C, 2 * D), lambda b: (b, 0, 0)),
                       pl.BlockSpec((1, 4, 2 * D), lambda b: (b, 0, 0)),
                       pl.BlockSpec((1, C, 1), lambda b: (b, 0, 0)))),
        compiler_params=pltpu.CompilerParams(
            dimension_semantics=("parallel",)),
    )(loc_t, loc2_t, conf, conf2, dbox_t)


# -----------------------------------------------------------------------------
# Kernel 2: greedy NMS over score-sorted top_k candidates.
#   boxes : (4, G, N)   -> x1/y1/x2/y2 each as a (Gb, N) lane-dense tile
#   valid : (G, N)      -> score > conf_thresh mask (f32)
#   keep  : (G, N)      -> 1.0 kept / 0.0 dropped
# Gb = 8 groups per grid step (groups on sublanes, candidates on lanes); the
# suppression state is carried in vregs through the fori_loop (no scratch).
# -----------------------------------------------------------------------------
def _nms_kernel(boxes_ref, valid_ref, keep_ref, *, nms_thresh):
    x1 = boxes_ref[0]                              # (Gb, N)
    y1 = boxes_ref[1]
    x2 = boxes_ref[2]
    y2 = boxes_ref[3]
    valid = valid_ref[...] > 0.5                   # preloaded into vregs
    areas = (x2 - x1) * (y2 - y1)                  # matches reference (no +1)
    gb, n = x1.shape
    lane = lax.broadcasted_iota(jnp.int32, (gb, n), 1)

    def pick(a, onehot):                           # one-hot lane extract -> (Gb, 1)
        return jnp.sum(jnp.where(onehot, a, 0.0), axis=1, keepdims=True)

    def body(i, suppressed):                       # suppressed: (Gb, N) bool carry
        onehot = lane == i
        bx1 = pick(x1, onehot)
        by1 = pick(y1, onehot)
        bx2 = pick(x2, onehot)
        by2 = pick(y2, onehot)
        barea = pick(areas, onehot)
        alive = jnp.logical_and(valid, jnp.logical_not(suppressed))
        pivot_alive = pick(jnp.where(alive, 1.0, 0.0), onehot) > 0.5   # (Gb, 1)

        ix1 = jnp.maximum(x1, bx1)
        iy1 = jnp.maximum(y1, by1)
        ix2 = jnp.minimum(x2, bx2)
        iy2 = jnp.minimum(y2, by2)
        iw = jnp.maximum(ix2 - ix1, 0.0)
        ih = jnp.maximum(iy2 - iy1, 0.0)
        inter = iw * ih
        union = areas - inter + barea
        iou = inter / union                        # exact divide (no approx here)

        new_sup = jnp.logical_and(
            jnp.logical_and(iou > nms_thresh, lane > i), pivot_alive)
        return jnp.logical_or(suppressed, new_sup)

    suppressed = lax.fori_loop(0, n, body, jnp.zeros((gb, n), dtype=jnp.bool_))
    keep = jnp.logical_and(valid, jnp.logical_not(suppressed))
    keep_ref[...] = jnp.where(keep, 1.0, 0.0)


def nms_pallas(boxes_4gn, valid_gn, nms_thresh, g_blk=8):
    _, G, N = boxes_4gn.shape
    assert G % g_blk == 0
    kernel = functools.partial(_nms_kernel, nms_thresh=float(nms_thresh))
    return pl.pallas_call(
        kernel,
        out_shape=jax.ShapeDtypeStruct((G, N), jnp.float32),
        grid_spec=pltpu.PrefetchScalarGridSpec(
            num_scalar_prefetch=0,
            grid=(G // g_blk,),
            in_specs=[pl.BlockSpec((4, g_blk, N), lambda g: (0, g, 0)),
                      pl.BlockSpec((g_blk, N), lambda g: (g, 0))],
            out_specs=pl.BlockSpec((g_blk, N), lambda g: (g, 0))),
        compiler_params=pltpu.CompilerParams(
            dimension_semantics=("parallel",)),
    )(boxes_4gn, valid_gn)


# -----------------------------------------------------------------------------
# Full forward (Detect_Flip.forward equivalent)
# -----------------------------------------------------------------------------
def detect_flip_forward(loc_data, conf_data, loc_data2, conf_data2, dbox_list,
                        conf_thresh=0.01, top_k=200, nms_thresh=0.45, TTA=True):
    B, D, _ = loc_data.shape
    C = conf_data.shape[2]

    # tiny tensors -> cheap external transposes; conf stays (B, D, C) and is
    # transposed once inside the kernel (saves a full HBM pass of the conf maps)
    loc_t = jnp.transpose(loc_data, (0, 2, 1))          # (B, 4, D)
    loc2_t = jnp.transpose(loc_data2, (0, 2, 1))        # (B, 4, D)
    dbox_t = jnp.transpose(dbox_list, (1, 0))           # (4, D)

    scores_all, boxes_all, maxs1 = preprocess_pallas(
        loc_t, loc2_t, conf_data, conf_data2, dbox_t)
    # scores_all: (B, C, 2D)  boxes_all: (B, 4, 2D)  maxs1: (B, C, 1)

    if not TTA:
        scores_all = scores_all[:, :, :D]
        boxes_all = boxes_all[:, :, :D]
    n_cand = scores_all.shape[-1]
    k = min(int(top_k), int(n_cand))

    # top_k by score per (b, c) instead of a full argsort of all candidates;
    # gather only the k winning boxes (no (B,C,2D,4) materialization).
    top_scores, top_idx = lax.top_k(scores_all, k)                 # (B, C, k)
    top_boxes = jnp.take_along_axis(boxes_all[:, None, :, :],      # (B, 1, 4, 2D)
                                    top_idx[:, :, None, :],        # (B, C, 1, k)
                                    axis=-1)                       # (B, C, 4, k)
    valid = top_scores > conf_thresh                               # (B, C, k)

    # ---- NMS over B*C groups, 8 per kernel block, candidates on lanes ----
    G = B * C
    g_blk = 8
    G_pad = ((G + g_blk - 1) // g_blk) * g_blk
    boxes_g = jnp.transpose(top_boxes.reshape(G, 4, k), (1, 0, 2))  # (4, G, k)
    valid_g = valid.reshape(G, k).astype(jnp.float32)
    if G_pad != G:
        boxes_g = jnp.pad(boxes_g, ((0, 0), (0, G_pad - G), (0, 0)))
        valid_g = jnp.pad(valid_g, ((0, G_pad - G), (0, 0)))
    keep = nms_pallas(boxes_g, valid_g, nms_thresh, g_blk)          # (G_pad, k)
    keep_bc = keep[:G].reshape(B, C, k) > 0.5

    # compact kept candidates to the front, preserving descending-score order
    perm = jnp.argsort(jnp.where(keep_bc, 0, 1), axis=-1, stable=True)   # (B,C,k)
    out_scores = jnp.take_along_axis(top_scores, perm, axis=-1)          # (B,C,k)
    out_boxes = jnp.take_along_axis(top_boxes, perm[:, :, None, :], axis=-1)
    count = jnp.sum(keep_bc, axis=-1)                                    # (B,C)

    if k < top_k:
        out_scores = jnp.pad(out_scores, ((0, 0), (0, 0), (0, top_k - k)))
        out_boxes = jnp.pad(out_boxes, ((0, 0), (0, 0), (0, 0), (0, top_k - k)))

    out_boxes = jnp.transpose(out_boxes, (0, 1, 3, 2))                   # (B,C,top_k,4)
    out5 = jnp.concatenate([out_scores[..., None], out_boxes], axis=-1)  # (B,C,top_k,5)

    slot = jnp.arange(top_k)
    slot_valid = slot[None, None, :] < count[..., None]
    out5 = jnp.where(slot_valid[..., None], out5, 0.0)

    # class 0 (background) skipped; class also skipped if image-1 has no score
    # above threshold ("if scores.nelement() == 0: continue").
    cls_mask = (jnp.arange(C) >= 1)[None, :]
    has_img1 = maxs1[..., 0] > conf_thresh                               # (B,C)
    final_mask = jnp.logical_and(cls_mask, has_img1)
    out5 = out5 * final_mask[..., None, None].astype(out5.dtype)
    return out5                                                          # (B,C,top_k,5)

# TODO(synk): softnms branch (self.softnms=True) is not implemented (its dynamic
# rescoring loop has no clean fixed-shape Pallas equivalent); default path only.


if __name__ == "__main__":
    B, D, C = 2, 128, 16
    key = jax.random.PRNGKey(0)
    k1, k2, k3, k4, k5, k6 = jax.random.split(key, 6)
    loc_data = 0.5 * jax.random.normal(k1, (B, D, 4), jnp.float32)
    loc_data2 = 0.5 * jax.random.normal(k2, (B, D, 4), jnp.float32)
    conf_data = jax.random.normal(k3, (B, D, C), jnp.float32)
    conf_data2 = jax.random.normal(k4, (B, D, C), jnp.float32)
    d_cxcy = jax.random.uniform(k5, (D, 2), jnp.float32, 0.1, 0.9)
    d_wh = jax.random.uniform(k6, (D, 2), jnp.float32, 0.05, 0.3)
    dbox_list = jnp.concatenate([d_cxcy, d_wh], axis=-1)

    out = detect_flip_forward(loc_data, conf_data, loc_data2, conf_data2,
                              dbox_list, conf_thresh=0.01, top_k=200,
                              nms_thresh=0.45, TTA=True)
    jax.block_until_ready(out)
    assert out.shape == (B, C, 200, 5) and out.dtype == jnp.float32
    print("KERNEL_OK")
</pallas_src>

<mosaic_0001>
module attributes {stable_mosaic.version = 11 : i64} {
  func.func @_preprocess_kernel(%arg0: i32, %arg1: memref<1x4x128xf32, #tpu.memory_space<vmem>>, %arg2: memref<1x4x128xf32, #tpu.memory_space<vmem>>, %arg3: memref<1x128x16xf32, #tpu.memory_space<vmem>>, %arg4: memref<1x128x16xf32, #tpu.memory_space<vmem>>, %arg5: memref<4x128xf32, #tpu.memory_space<vmem>>, %arg6: memref<1x16x256xf32, #tpu.memory_space<vmem>>, %arg7: memref<1x4x256xf32, #tpu.memory_space<vmem>>, %arg8: memref<1x16x1xf32, #tpu.memory_space<vmem>>) attributes {dimension_semantics = [#tpu.dimension_semantics<parallel>], iteration_bounds = array<i64: 2>, scalar_prefetch = 0 : i64, scratch_operands = 0 : i64, tpu.core_type = #tpu.core_type<tc>, window_params = [{transform_indices = @transform_0, window_bounds = array<i64: 1, 4, 128>}, {transform_indices = @transform_1, window_bounds = array<i64: 1, 4, 128>}, {transform_indices = @transform_2, window_bounds = array<i64: 1, 128, 16>}, {transform_indices = @transform_3, window_bounds = array<i64: 1, 128, 16>}, {pipeline_mode = #tpu.pipeline_mode<synchronous>, transform_indices = @transform_4, window_bounds = array<i64: 4, 128>}, {transform_indices = @transform_5, window_bounds = array<i64: 1, 16, 256>}, {transform_indices = @transform_6, window_bounds = array<i64: 1, 4, 256>}, {transform_indices = @transform_7, window_bounds = array<i64: 1, 16, 1>}]} {
    %c0 = arith.constant 0 : index
    %c0_0 = arith.constant 0 : index
    %c0_1 = arith.constant 0 : index
    %0 = vector.load %arg3[%c0, %c0_0, %c0_1] : memref<1x128x16xf32, #tpu.memory_space<vmem>>, vector<1x128x16xf32>
    %1 = vector.shape_cast %0 : vector<1x128x16xf32> to vector<128x16xf32>
    %2 = tpu.transpose %1, [1, 0] : vector<128x16xf32> -> vector<16x128xf32>
    %cst = arith.constant dense<0xFF800000> : vector<128xf32>
    %3 = vector.multi_reduction <maximumf>, %2, %cst [0] : vector<16x128xf32> to vector<128xf32>
    %4 = vector.shape_cast %3 : vector<128xf32> to vector<1x128xf32>
    %5 = vector.broadcast %4 : vector<1x128xf32> to vector<16x128xf32>
    %6 = arith.subf %2, %5 : vector<16x128xf32>
    %7 = math.exp %6 : vector<16x128xf32>
    %cst_2 = arith.constant dense<0.000000e+00> : vector<128xf32>
    %8 = vector.multi_reduction <add>, %7, %cst_2 [0] : vector<16x128xf32> to vector<128xf32>
    %9 = vector.shape_cast %8 : vector<128xf32> to vector<1x128xf32>
    %10 = tpu.reciprocal %9 {approx = true} : vector<1x128xf32> -> vector<1x128xf32>
    %11 = vector.broadcast %10 : vector<1x128xf32> to vector<16x128xf32>
    %12 = arith.mulf %7, %11 : vector<16x128xf32>
    %c0_3 = arith.constant 0 : index
    %c0_4 = arith.constant 0 : index
    %c0_5 = arith.constant 0 : index
    %13 = vector.load %arg4[%c0_3, %c0_4, %c0_5] : memref<1x128x16xf32, #tpu.memory_space<vmem>>, vector<1x128x16xf32>
    %14 = vector.shape_cast %13 : vector<1x128x16xf32> to vector<128x16xf32>
    %15 = tpu.transpose %14, [1, 0] : vector<128x16xf32> -> vector<16x128xf32>
    %cst_6 = arith.constant dense<0xFF800000> : vector<128xf32>
    %16 = vector.multi_reduction <maximumf>, %15, %cst_6 [0] : vector<16x128xf32> to vector<128xf32>
    %17 = vector.shape_cast %16 : vector<128xf32> to vector<1x128xf32>
    %18 = vector.broadcast %17 : vector<1x128xf32> to vector<16x128xf32>
    %19 = arith.subf %15, %18 : vector<16x128xf32>
    %20 = math.exp %19 : vector<16x128xf32>
    %cst_7 = arith.constant dense<0.000000e+00> : vector<128xf32>
    %21 = vector.multi_reduction <add>, %20, %cst_7 [0] : vector<16x128xf32> to vector<128xf32>
    %22 = vector.shape_cast %21 : vector<128xf32> to vector<1x128xf32>
    %23 = tpu.reciprocal %22 {approx = true} : vector<1x128xf32> -> vector<1x128xf32>
    %24 = vector.broadcast %23 : vector<1x128xf32> to vector<16x128xf32>
    %25 = arith.mulf %20, %24 : vector<16x128xf32>
    %c0_8 = arith.constant 0 : index
    %c0_9 = arith.constant 0 : index
    %c0_10 = arith.constant 0 : index
    %26 = vector.load %arg6[%c0_8, %c0_9, %c0_10] : memref<1x16x256xf32, #tpu.memory_space<vmem>>, vector<1x16x128xf32>
    %27 = vector.shape_cast %26 : vector<1x16x128xf32> to vector<16x128xf32>
    %28 = vector.shape_cast %12 : vector<16x128xf32> to vector<1x16x128xf32>
    tpu.vector_store %arg6[%c0_8, %c0_9, %c0_10], %28 {strides = array<i32>} : memref<1x16x256xf32, #tpu.memory_space<vmem>>, vector<1x16x128xf32>,
    %c0_11 = arith.constant 0 : index
    %c0_12 = arith.constant 0 : index
    %c128 = arith.constant 128 : index
    %29 = vector.load %arg6[%c0_11, %c0_12, %c128] : memref<1x16x256xf32, #tpu.memory_space<vmem>>, vector<1x16x128xf32>
    %30 = vector.shape_cast %29 : vector<1x16x128xf32> to vector<16x128xf32>
    %31 = vector.shape_cast %25 : vector<16x128xf32> to vector<1x16x128xf32>
    tpu.vector_store %arg6[%c0_11, %c0_12, %c128], %31 {strides = array<i32>} : memref<1x16x256xf32, #tpu.memory_space<vmem>>, vector<1x16x128xf32>,
    %cst_13 = arith.constant dense<0xFF800000> : vector<16xf32>
    %32 = vector.multi_reduction <maximumf>, %12, %cst_13 [1] : vector<16x128xf32> to vector<16xf32>
    %33 = vector.shape_cast %32 : vector<16xf32> to vector<16x1xf32>
    %c0_14 = arith.constant 0 : index
    %c0_15 = arith.constant 0 : index
    %c0_16 = arith.constant 0 : index
    %34 = vector.load %arg8[%c0_14, %c0_15, %c0_16] : memref<1x16x1xf32, #tpu.memory_space<vmem>>, vector<1x16x1xf32>
    %35 = vector.shape_cast %34 : vector<1x16x1xf32> to vector<16x1xf32>
    %36 = vector.shape_cast %33 : vector<16x1xf32> to vector<1x16x1xf32>
    tpu.vector_store %arg8[%c0_14, %c0_15, %c0_16], %36 {strides = array<i32>} : memref<1x16x1xf32, #tpu.memory_space<vmem>>, vector<1x16x1xf32>,
    %c0_17 = arith.constant 0 : index
    %c0_18 = arith.constant 0 : index
    %37 = vector.load %arg5[%c0_17, %c0_18] : memref<4x128xf32, #tpu.memory_space<vmem>>, vector<4x128xf32>
    %38 = vector.extract_strided_slice %37 {offsets = [0, 0], sizes = [2, 128], strides = [1, 1]} : vector<4x128xf32> to vector<2x128xf32>
    %39 = vector.extract_strided_slice %37 {offsets = [2, 0], sizes = [2, 128], strides = [1, 1]} : vector<4x128xf32> to vector<2x128xf32>
    %c0_19 = arith.constant 0 : index
    %c0_20 = arith.constant 0 : index
    %c0_21 = arith.constant 0 : index
    %40 = vector.load %arg1[%c0_19, %c0_20, %c0_21] : memref<1x4x128xf32, #tpu.memory_space<vmem>>, vector<1x4x128xf32>
    %41 = vector.shape_cast %40 : vector<1x4x128xf32> to vector<4x128xf32>
    %42 = vector.extract_strided_slice %41 {offsets = [0, 0], sizes = [2, 128], strides = [1, 1]} : vector<4x128xf32> to vector<2x128xf32>
    %cst_22 = arith.constant 1.000000e-01 : f32
    %43 = vector.broadcast %cst_22 : f32 to vector<2x128xf32>
    %44 = arith.mulf %42, %43 : vector<2x128xf32>
    %45 = arith.mulf %44, %39 : vector<2x128xf32>
    %46 = arith.addf %38, %45 : vector<2x128xf32>
    %47 = vector.extract_strided_slice %41 {offsets = [2, 0], sizes = [2, 128], strides = [1, 1]} : vector<4x128xf32> to vector<2x128xf32>
    %cst_23 = arith.constant 2.000000e-01 : f32
    %48 = vector.broadcast %cst_23 : f32 to vector<2x128xf32>
    %49 = arith.mulf %47, %48 : vector<2x128xf32>
    %50 = math.exp %49 : vector<2x128xf32>
    %51 = arith.mulf %39, %50 : vector<2x128xf32>
    %cst_24 = arith.constant 5.000000e-01 : f32
    %52 = vector.broadcast %cst_24 : f32 to vector<2x128xf32>
    %53 = arith.mulf %52, %51 : vector<2x128xf32>
    %54 = arith.subf %46, %53 : vector<2x128xf32>
    %55 = arith.addf %54, %51 : vector<2x128xf32>
    %56 = tpu.concatenate %54, %55 in 0 : vector<2x128xf32>, vector<2x128xf32> -> vector<4x128xf32>
    %c0_25 = arith.constant 0 : index
    %c0_26 = arith.constant 0 : index
    %c0_27 = arith.constant 0 : index
    %57 = vector.load %arg7[%c0_25, %c0_26, %c0_27] : memref<1x4x256xf32, #tpu.memory_space<vmem>>, vector<1x4x128xf32>
    %58 = vector.shape_cast %57 : vector<1x4x128xf32> to vector<4x128xf32>
    %59 = vector.shape_cast %56 : vector<4x128xf32> to vector<1x4x128xf32>
    tpu.vector_store %arg7[%c0_25, %c0_26, %c0_27], %59 {strides = array<i32>} : memref<1x4x256xf32, #tpu.memory_space<vmem>>, vector<1x4x128xf32>,
    %c0_28 = arith.constant 0 : index
    %c0_29 = arith.constant 0 : index
    %c0_30 = arith.constant 0 : index
    %60 = vector.load %arg2[%c0_28, %c0_29, %c0_30] : memref<1x4x128xf32, #tpu.memory_space<vmem>>, vector<1x4x128xf32>
    %61 = vector.shape_cast %60 : vector<1x4x128xf32> to vector<4x128xf32>
    %62 = vector.extract_strided_slice %61 {offsets = [0, 0], sizes = [2, 128], strides = [1, 1]} : vector<4x128xf32> to vector<2x128xf32>
    %cst_31 = arith.constant 1.000000e-01 : f32
    %63 = vector.broadcast %cst_31 : f32 to vector<2x128xf32>
    %64 = arith.mulf %62, %63 : vector<2x128xf32>
    %65 = arith.mulf %64, %39 : vector<2x128xf32>
    %66 = arith.addf %38, %65 : vector<2x128xf32>
    %67 = vector.extract_strided_slice %61 {offsets = [2, 0], sizes = [2, 128], strides = [1, 1]} : vector<4x128xf32> to vector<2x128xf32>
    %cst_32 = arith.constant 2.000000e-01 : f32
    %68 = vector.broadcast %cst_32 : f32 to vector<2x128xf32>
    %69 = arith.mulf %67, %68 : vector<2x128xf32>
    %70 = math.exp %69 : vector<2x128xf32>
    %71 = arith.mulf %39, %70 : vector<2x128xf32>
    %cst_33 = arith.constant 5.000000e-01 : f32
    %72 = vector.broadcast %cst_33 : f32 to vector<2x128xf32>
    %73 = arith.mulf %72, %71 : vector<2x128xf32>
    %74 = arith.subf %66, %73 : vector<2x128xf32>
    %75 = arith.addf %74, %71 : vector<2x128xf32>
    %76 = tpu.concatenate %74, %75 in 0 : vector<2x128xf32>, vector<2x128xf32> -> vector<4x128xf32>
    %77 = vector.extract_strided_slice %76 {offsets = [2, 0], sizes = [1, 128], strides = [1, 1]} : vector<4x128xf32> to vector<1x128xf32>
    %cst_34 = arith.constant 1.000000e+00 : f32
    %78 = vector.broadcast %cst_34 : f32 to vector<1x128xf32>
    %79 = arith.subf %78, %77 : vector<1x128xf32>
    %80 = vector.extract_strided_slice %76 {offsets = [1, 0], sizes = [1, 128], strides = [1, 1]} : vector<4x128xf32> to vector<1x128xf32>
    %cst_35 = arith.constant 1.000000e+00 : f32
    %81 = vector.broadcast %cst_35 : f32 to vector<1x128xf32>
    %82 = arith.subf %81, %79 : vector<1x128xf32>
    %83 = vector.extract_strided_slice %76 {offsets = [3, 0], sizes = [1, 128], strides = [1, 1]} : vector<4x128xf32> to vector<1x128xf32>
    %84 = tpu.concatenate %79, %80, %82, %83 in 0 : vector<1x128xf32>, vector<1x128xf32>, vector<1x128xf32>, vector<1x128xf32> -> vector<4x128xf32>
    %c0_36 = arith.constant 0 : index
    %c0_37 = arith.constant 0 : index
    %c128_38 = arith.constant 128 : index
    %85 = vector.load %arg7[%c0_36, %c0_37, %c128_38] : memref<1x4x256xf32, #tpu.memory_space<vmem>>, vector<1x4x128xf32>
    %86 = vector.shape_cast %85 : vector<1x4x128xf32> to vector<4x128xf32>
    %87 = vector.shape_cast %84 : vector<4x128xf32> to vector<1x4x128xf32>
    tpu.vector_store %arg7[%c0_36, %c0_37, %c128_38], %87 {strides = array<i32>} : memref<1x4x256xf32, #tpu.memory_space<vmem>>, vector<1x4x128xf32>,
    return
  }
  func.func @transform_0(%arg0: i32) -> (i32, i32, i32) {
    %c0_i32 = arith.constant 0 : i32
    %c0_i32_0 = arith.constant 0 : i32
    %c0_i32_1 = arith.constant 0 : i32
    return %arg0, %c0_i32, %c0_i32_0 : i32, i32, i32
  }
  func.func @transform_1(%arg0: i32) -> (i32, i32, i32) {
    %c0_i32 = arith.constant 0 : i32
    %c0_i32_0 = arith.constant 0 : i32
    %c0_i32_1 = arith.constant 0 : i32
    return %arg0, %c0_i32, %c0_i32_0 : i32, i32, i32
  }
  func.func @transform_2(%arg0: i32) -> (i32, i32, i32) {
    %c0_i32 = arith.constant 0 : i32
    %c0_i32_0 = arith.constant 0 : i32
    %c0_i32_1 = arith.constant 0 : i32
    return %arg0, %c0_i32, %c0_i32_0 : i32, i32, i32
  }
  func.func @transform_3(%arg0: i32) -> (i32, i32, i32) {
    %c0_i32 = arith.constant 0 : i32
    %c0_i32_0 = arith.constant 0 : i32
    %c0_i32_1 = arith.constant 0 : i32
    return %arg0, %c0_i32, %c0_i32_0 : i32, i32, i32
  }
  func.func @transform_4(%arg0: i32) -> (i32, i32) {
    %c0_i32 = arith.constant 0 : i32
    %c0_i32_0 = arith.constant 0 : i32
    %c0_i32_1 = arith.constant 0 : i32
    return %c0_i32, %c0_i32_0 : i32, i32
  }
  func.func @transform_5(%arg0: i32) -> (i32, i32, i32) {
    %c0_i32 = arith.constant 0 : i32
    %c0_i32_0 = arith.constant 0 : i32
    %c0_i32_1 = arith.constant 0 : i32
    return %arg0, %c0_i32, %c0_i32_0 : i32, i32, i32
  }
  func.func @transform_6(%arg0: i32) -> (i32, i32, i32) {
    %c0_i32 = arith.constant 0 : i32
    %c0_i32_0 = arith.constant 0 : i32
    %c0_i32_1 = arith.constant 0 : i32
    return %arg0, %c0_i32, %c0_i32_0 : i32, i32, i32
  }
  func.func @transform_7(%arg0: i32) -> (i32, i32, i32) {
    %c0_i32 = arith.constant 0 : i32
    %c0_i32_0 = arith.constant 0 : i32
    %c0_i32_1 = arith.constant 0 : i32
    return %arg0, %c0_i32, %c0_i32_0 : i32, i32, i32
  }
}

</mosaic_0001>

<llo_original>
// kernel: tpu_custom_call.1
$region0: #{tpu_custom_call.1}
  #allocation0 [shape = 'u32[]', space=smem, size = 0x4, offset = 0x4, fixed_abs, tag = 'smem constant byte address 0x4 - core index']
  #allocation1 [shape = 'u32[144,128]{1,0:T(1,128)}', space=vmem, size = 0x12000, scoped, tag = 'internal scratch']
  %s0 = inlined_call_operand.vmem [shape: f32[2,4,128], index: 0, kind: input, shape index: {}]
  %s1 = inlined_call_operand.vmem [shape: f32[2,4,128], index: 1, kind: input, shape index: {}]
  %s2 = inlined_call_operand.vmem [shape: f32[2,128,16], index: 2, kind: input, shape index: {}]
  %s3 = inlined_call_operand.vmem [shape: f32[2,128,16], index: 3, kind: input, shape index: {}]
  %s4 = inlined_call_operand.vmem [shape: f32[4,128], index: 4, kind: input, shape index: {}]
  %s5 = inlined_call_operand.hbm [shape: f32[2,16,256], index: 5, kind: output, shape index: {0}]
  %s6 = inlined_call_operand.hbm [shape: f32[2,4,256], index: 6, kind: output, shape index: {1}]
  %s7 = inlined_call_operand.vmem [shape: f32[2,16,1], index: 7, kind: output, shape index: {2}]
  %8 = xla_tuple %s5, %s6, %s7
  %s9 = sld [smem:[#allocation0]]
  $region69: #{tpu_custom_call.1} parent=0
    _
  %s11 = ssub.s32 1, %s9
  %s12 = scalar_select 0, %s11, %s9
  $region1: #{tpu_custom_call.1} parent=0
    #allocation2 [shape = 'u8[32768]{0}', space=vmem, size = 0x8000, scoped, tag = 'output window, operand 0']
    #allocation3 [shape = 's32[2]{0}', space=sflag, size = 0x8, scoped, tag = 'scoped memory for tpu_custom_call.1']
    #allocation4 [shape = 'u8[8192]{0}', space=vmem, size = 0x2000, scoped, tag = 'output window, operand 1']
    #allocation5 [shape = 's32[2]{0}', space=sflag, size = 0x8, scoped, tag = 'scoped memory for tpu_custom_call.1']
    %13 = vsyncpa [#allocation3], 0
    %s14 = scalar_lea.sflag [#allocation3], 1
    %15 = vsyncpa %s14, 0
    %16 = vsyncpa [#allocation5], 0
    %s17 = scalar_lea.sflag [#allocation5], 1
    %18 = vsyncpa %s17, 0
    loop: start=0, step=1, limit=4
    $region2: #{tpu_custom_call.1} parent=1 // loop_pre_header
      _
    $region3: #{tpu_custom_call.1} parent=1 // loop_header
      %s20 = sphi 0, %s24
      %p21 = scmp.ge.s32.totalorder %s20, 4
      %s30 = sphi 0, %s32
      %s33 = sphi 0, %s30
      %s34 = sphi 0, %s33
      %s50 = sphi 0, %s34
      %s56 = sphi 0, %s58
      %s59 = sphi 0, %s56
      %s60 = sphi 0, %s59
      %s76 = sphi 0, %s60
      %s82 = sphi 0, %s84
      %s85 = sphi 0, %s82
      %s86 = sphi 0, %s85
      %s102 = sphi 0, %s86
      %s108 = sphi 0, %s110
      %s111 = sphi 0, %s108
      %s112 = sphi 0, %s111
      %s128 = sphi 0, %s112
      %s132 = sphi 0, %s132
      %s134 = sphi 0, %s132
      %s135 = sphi 0, %s134
      %s149 = sphi 0, %s135
      %s155 = sphi 0, %s157
      %s158 = sphi 0, %s155
      %s159 = sphi 0, %s158
      %s175 = sphi 0, %s159
      %s181 = sphi 0, %s183
      %s184 = sphi 0, %s181
      %s185 = sphi 0, %s184
      %s201 = sphi 0, %s185
      %s207 = sphi 0, %s209
      %s210 = sphi 0, %s207
      %s211 = sphi 0, %s210
      %s227 = sphi 0, %s211
    $region4: #{tpu_custom_call.1} parent=1 // loop_header_branch
      %23 = sbr.rel (%p21) target = $region8
    $region5: #{tpu_custom_call.1} parent=1 // loop_body
      %s25 = ssub.s32 %s20, 1
      %s26 = ssub.s32 %s20, 2
      %s27 = sadd.s32 %s20, 1
      %s28 = ssub.s32 %s20, %s27
      %p29 = scmp.eq.s32.totalorder %s28, 0
      %s31 = sadd.s32 %s30, 1
      %s32 = scalar_select %p29, %s30, %s31
      %p35 = pneg %p29
      %p36 = scmp.eq.s32.totalorder %s20, 1
      %p37 = por %p35, %p36
      %p38 = scmp.ne.s32.totalorder %s30, %s33
      %p39 = scmp.eq.s32.totalorder %s20, 0
      %p40 = por %p38, %p39
      %p41 = scmp.ne.s32.totalorder %s30, %s33
      %p42 = scmp.eq.s32.totalorder %s25, 1
      %p43 = por %p41, %p42
      %p44 = scmp.ne.s32.totalorder %s33, %s34
      %p45 = scmp.eq.s32.totalorder %s25, 0
      %p46 = por %p44, %p45
      %p47 = scmp.ne.s32.totalorder %s33, %s34
      %p48 = scmp.eq.s32.totalorder %s26, 1
      %p49 = por %p47, %p48
      %p51 = scmp.ne.s32.totalorder %s34, %s50
      %p52 = scmp.eq.s32.totalorder %s26, 0
      %p53 = por %p51, %p52
      %s54 = ssub.s32 %s20, %s27
      %p55 = scmp.eq.s32.totalorder %s54, 0
      %s57 = sadd.s32 %s56, 1
      %s58 = scalar_select %p55, %s56, %s57
      %p61 = pneg %p55
      %p62 = scmp.eq.s32.totalorder %s20, 1
      %p63 = por %p61, %p62
      %p64 = scmp.ne.s32.totalorder %s56, %s59
      %p65 = scmp.eq.s32.totalorder %s20, 0
      %p66 = por %p64, %p65
      %p67 = scmp.ne.s32.totalorder %s56, %s59
      %p68 = scmp.eq.s32.totalorder %s25, 1
      %p69 = por %p67, %p68
      %p70 = scmp.ne.s32.totalorder %s59, %s60
      %p71 = scmp.eq.s32.totalorder %s25, 0
      %p72 = por %p70, %p71
      %p73 = scmp.ne.s32.totalorder %s59, %s60
      %p74 = scmp.eq.s32.totalorder %s26, 1
      %p75 = por %p73, %p74
      %p77 = scmp.ne.s32.totalorder %s60, %s76
      %p78 = scmp.eq.s32.totalorder %s26, 0
      %p79 = por %p77, %p78
      %s80 = ssub.s32 %s20, %s27
      %p81 = scmp.eq.s32.totalorder %s80, 0
      %s83 = sadd.s32 %s82, 1
      %s84 = scalar_select %p81, %s82, %s83
      %p87 = pneg %p81
      %p88 = scmp.eq.s32.totalorder %s20, 1
      %p89 = por %p87, %p88
      %p90 = scmp.ne.s32.totalorder %s82, %s85
      %p91 = scmp.eq.s32.totalorder %s20, 0
      %p92 = por %p90, %p91
      %p93 = scmp.ne.s32.totalorder %s82, %s85
      %p94 = scmp.eq.s32.totalorder %s25, 1
      %p95 = por %p93, %p94
      %p96 = scmp.ne.s32.totalorder %s85, %s86
      %p97 = scmp.eq.s32.totalorder %s25, 0
      %p98 = por %p96, %p97
      %p99 = scmp.ne.s32.totalorder %s85, %s86
      %p100 = scmp.eq.s32.totalorder %s26, 1
      %p101 = por %p99, %p100
      %p103 = scmp.ne.s32.totalorder %s86, %s102
      %p104 = scmp.eq.s32.totalorder %s26, 0
      %p105 = por %p103, %p104
      %s106 = ssub.s32 %s20, %s27
      %p107 = scmp.eq.s32.totalorder %s106, 0
      %s109 = sadd.s32 %s108, 1
      %s110 = scalar_select %p107, %s108, %s109
      %p113 = pneg %p107
      %p114 = scmp.eq.s32.totalorder %s20, 1
      %p115 = por %p113, %p114
      %p116 = scmp.ne.s32.totalorder %s108, %s111
      %p117 = scmp.eq.s32.totalorder %s20, 0
      %p118 = por %p116, %p117
      %p119 = scmp.ne.s32.totalorder %s108, %s111
      %p120 = scmp.eq.s32.totalorder %s25, 1
      %p121 = por %p119, %p120
      %p122 = scmp.ne.s32.totalorder %s111, %s112
      %p123 = scmp.eq.s32.totalorder %s25, 0
      %p124 = por %p122, %p123
      %p125 = scmp.ne.s32.totalorder %s111, %s112
      %p126 = scmp.eq.s32.totalorder %s26, 1
      %p127 = por %p125, %p126
      %p129 = scmp.ne.s32.totalorder %s112, %s128
      %p130 = scmp.eq.s32.totalorder %s26, 0
      %p131 = por %p129, %p130
      %s133 = sadd.s32 %s132, 1
      %p136 = scmp.eq.s32.totalorder %s20, 1
      %p137 = scmp.ne.s32.totalorder %s132, %s134
      %p138 = scmp.eq.s32.totalorder %s20, 0
      %p139 = por %p137, %p138
      %p140 = scmp.ne.s32.totalorder %s132, %s134
      %p141 = scmp.eq.s32.totalorder %s25, 1
      %p142 = por %p140, %p141
      %p143 = scmp.ne.s32.totalorder %s134, %s135
      %p144 = scmp.eq.s32.totalorder %s25, 0
      %p145 = por %p143, %p144
      %p146 = scmp.ne.s32.totalorder %s134, %s135
      %p147 = scmp.eq.s32.totalorder %s26, 1
      %p148 = por %p146, %p147
      %p150 = scmp.ne.s32.totalorder %s135, %s149
      %p151 = scmp.eq.s32.totalorder %s26, 0
      %p152 = por %p150, %p151
      %s153 = ssub.s32 %s20, %s27
      %p154 = scmp.eq.s32.totalorder %s153, 0
      %s156 = sadd.s32 %s155, 1
      %s157 = scalar_select %p154, %s155, %s156
      %p160 = pneg %p154
      %p161 = scmp.eq.s32.totalorder %s20, 1
      %p162 = por %p160, %p161
      %p163 = scmp.ne.s32.totalorder %s155, %s158
      %p164 = scmp.eq.s32.totalorder %s20, 0
      %p165 = por %p163, %p164
      %p166 = scmp.ne.s32.totalorder %s155, %s158
      %p167 = scmp.eq.s32.totalorder %s25, 1
      %p168 = por %p166, %p167
      %p169 = scmp.ne.s32.totalorder %s158, %s159
      %p170 = scmp.eq.s32.totalorder %s25, 0
      %p171 = por %p169, %p170
      %p172 = scmp.ne.s32.totalorder %s158, %s159
      %p173 = scmp.eq.s32.totalorder %s26, 1
      %p174 = por %p172, %p173
      %p176 = scmp.ne.s32.totalorder %s159, %s175
      %p177 = scmp.eq.s32.totalorder %s26, 0
      %p178 = por %p176, %p177
      %s179 = ssub.s32 %s20, %s27
      %p180 = scmp.eq.s32.totalorder %s179, 0
      %s182 = sadd.s32 %s181, 1
      %s183 = scalar_select %p180, %s181, %s182
      %p186 = pneg %p180
      %p187 = scmp.eq.s32.totalorder %s20, 1
      %p188 = por %p186, %p187
      %p189 = scmp.ne.s32.totalorder %s181, %s184
      %p190 = scmp.eq.s32.totalorder %s20, 0
      %p191 = por %p189, %p190
      %p192 = scmp.ne.s32.totalorder %s181, %s184
      %p193 = scmp.eq.s32.totalorder %s25, 1
      %p194 = por %p192, %p193
      %p195 = scmp.ne.s32.totalorder %s184, %s185
      %p196 = scmp.eq.s32.totalorder %s25, 0
      %p197 = por %p195, %p196
      %p198 = scmp.ne.s32.totalorder %s184, %s185
      %p199 = scmp.eq.s32.totalorder %s26, 1
      %p200 = por %p198, %p199
      %p202 = scmp.ne.s32.totalorder %s185, %s201
      %p203 = scmp.eq.s32.totalorder %s26, 0
      %p204 = por %p202, %p203
      %s205 = ssub.s32 %s20, %s27
      %p206 = scmp.eq.s32.totalorder %s205, 0
      %s208 = sadd.s32 %s207, 1
      %s209 = scalar_select %p206, %s207, %s208
      %p212 = pneg %p206
      %p213 = scmp.eq.s32.totalorder %s20, 1
      %p214 = por %p212, %p213
      %p215 = scmp.ne.s32.totalorder %s207, %s210
      %p216 = scmp.eq.s32.totalorder %s20, 0
      %p217 = por %p215, %p216
      %p218 = scmp.ne.s32.totalorder %s207, %s210
      %p219 = scmp.eq.s32.totalorder %s25, 1
      %p220 = por %p218, %p219
      %p221 = scmp.ne.s32.totalorder %s210, %s211
      %p222 = scmp.eq.s32.totalorder %s25, 0
      %p223 = por %p221, %p222
      %p224 = scmp.ne.s32.totalorder %s210, %s211
      %p225 = scmp.eq.s32.totalorder %s26, 1
      %p226 = por %p224, %p225
      %p228 = scmp.ne.s32.totalorder %s211, %s227
      %p229 = scmp.eq.s32.totalorder %s26, 0
      %p230 = por %p228, %p229
      %p231 = scmp.le.s32.totalorder 1, %s20
      %p232 = scmp.lt.s32.totalorder %s20, 3
      %p233 = pnand %p231, %p232
      %p234 = pneg %p233
      // Predicated region
      $region9: #{tpu_custom_call.1} parent=5 // pred_check
        _
      $region10: #{tpu_custom_call.1} parent=5 // pred_check_branch
        %236 = sbr.rel (%p233) target = $region12
      $region11: #{tpu_custom_call.1} parent=5 // pred_region
        %s237 = ssub.s32 %s20, 1
        // Predicated region
        $region13: #{tpu_custom_call.1} parent=11 // pred_check
          %p238 = pneg %p145
        $region14: #{tpu_custom_call.1} parent=11 // pred_check_branch
          %240 = sbr.rel (%p238) target = $region16
        $region15: #{tpu_custom_call.1} parent=11 // pred_region
          _
        $region16: #{tpu_custom_call.1} parent=11 // pred_fallthru
          _
      $region12: #{tpu_custom_call.1} parent=5 // pred_fallthru
        _
      %p241 = scmp.lt.s32.totalorder %s20, 2
      // Predicated region
      $region17: #{tpu_custom_call.1} parent=5 // pred_check
        %p242 = pneg %p241
      $region18: #{tpu_custom_call.1} parent=5 // pred_check_branch
        %244 = sbr.rel (%p242) target = $region20
      $region19: #{tpu_custom_call.1} parent=5 // pred_region
        // Predicated region
        $region21: #{tpu_custom_call.1} parent=19 // pred_check
          %p245 = pneg %p40
        $region22: #{tpu_custom_call.1} parent=19 // pred_check_branch
          %247 = sbr.rel (%p245) target = $region24
        $region23: #{tpu_custom_call.1} parent=19 // pred_region
          %p248 = scmp.lt.s32.totalorder %s20, 1
          %s249 = scalar_select %p248, %s20, 1
          %s250 = smul.addr %s249, 4
          %s251 = scalar_lea.vmem %s0, %s250
        $region24: #{tpu_custom_call.1} parent=19 // pred_fallthru
          _
        // Predicated region
        $region25: #{tpu_custom_call.1} parent=19 // pred_check
          %p252 = pneg %p66
        $region26: #{tpu_custom_call.1} parent=19 // pred_check_branch
          %254 = sbr.rel (%p252) target = $region28
        $region27: #{tpu_custom_call.1} parent=19 // pred_region
          %p255 = scmp.lt.s32.totalorder %s20, 1
          %s256 = scalar_select %p255, %s20, 1
          %s257 = smul.addr %s256, 4
          %s258 = scalar_lea.vmem %s1, %s257
        $region28: #{tpu_custom_call.1} parent=19 // pred_fallthru
          _
        // Predicated region
        $region29: #{tpu_custom_call.1} parent=19 // pred_check
          %p259 = pneg %p92
        $region30: #{tpu_custom_call.1} parent=19 // pred_check_branch
          %261 = sbr.rel (%p259) target = $region32
        $region31: #{tpu_custom_call.1} parent=19 // pred_region
          %p262 = scmp.lt.s32.totalorder %s20, 1
          %s263 = scalar_select %p262, %s20, 1
          %s264 = smul.addr %s263, 16
          %s265 = smul.addr %s264, 8
          %s266 = scalar_lea.vmem %s2, %s265
        $region32: #{tpu_custom_call.1} parent=19 // pred_fallthru
          _
        // Predicated region
        $region33: #{tpu_custom_call.1} parent=19 // pred_check
          %p267 = pneg %p118
        $region34: #{tpu_custom_call.1} parent=19 // pred_check_branch
          %269 = sbr.rel (%p267) target = $region36
        $region35: #{tpu_custom_call.1} parent=19 // pred_region
          %p270 = scmp.lt.s32.totalorder %s20, 1
          %s271 = scalar_select %p270, %s20, 1
          %s272 = smul.addr %s271, 16
          %s273 = smul.addr %s272, 8
          %s274 = scalar_lea.vmem %s3, %s273
        $region36: #{tpu_custom_call.1} parent=19 // pred_fallthru
          _
      $region20: #{tpu_custom_call.1} parent=5 // pred_fallthru
        _
      %p275 = scmp.le.s32.totalorder 1, %s20
      %p276 = scmp.lt.s32.totalorder %s20, 3
      %p277 = pnand %p275, %p276
      %p278 = pneg %p277
      // Predicated region
      $region37: #{tpu_custom_call.1} parent=5 // pred_check
        _
      $region38: #{tpu_custom_call.1} parent=5 // pred_check_branch
        %280 = sbr.rel (%p277) target = $region40
      $region39: #{tpu_custom_call.1} parent=5 // pred_region
        %s281 = ssub.s32 %s20, 1
        %p282 = scmp.lt.s32.totalorder %s25, 1
        %s283 = scalar_select %p282, %s25, 1
        %s284 = smul.addr %s283, 4
        %s285 = scalar_lea.vmem %s0, %s284
        %p286 = pneg %p46
        %p287 = pneg %p43
        %p288 = scmp.lt.s32.totalorder %s25, 1
        %s289 = scalar_select %p288, %s25, 1
        %s290 = smul.addr %s289, 4
        %s291 = scalar_lea.vmem %s1, %s290
        %p292 = pneg %p72
        %p293 = pneg %p69
        %p294 = scmp.lt.s32.totalorder %s25, 1
        %s295 = scalar_select %p294, %s25, 1
        %s296 = smul.addr %s295, 16
        %s297 = smul.addr %s296, 8
        %s298 = scalar_lea.vmem %s2, %s297
        %p299 = pneg %p98
        %p300 = pneg %p95
        %p301 = scmp.lt.s32.totalorder %s25, 1
        %s302 = scalar_select %p301, %s25, 1
        %s303 = smul.addr %s302, 16
        %s304 = smul.addr %s303, 8
        %s305 = scalar_lea.vmem %s3, %s304
        %p306 = pneg %p124
        %p307 = pneg %p121
        %p308 = pneg %p145
        %p309 = pneg %p142
        %p310 = pneg %p171
        %p311 = pneg %p168
        %s312 = sand.u32 %s158, 1
        %s313 = scalar_lea.sflag [#allocation3], %s312
        %s314 = sand.u32 %s158, 1
        %s315 = smul.addr %s314, 32
        %s316 = scalar_lea.vmem [#allocation2], %s315
        %p317 = pneg %p197
        %p318 = pneg %p194
        %s319 = sand.u32 %s184, 1
        %s320 = scalar_lea.sflag [#allocation5], %s319
        %s321 = sand.u32 %s184, 1
        %s322 = smul.addr %s321, 8
        %s323 = scalar_lea.vmem [#allocation4], %s322
        %p324 = pneg %p223
        %p325 = pneg %p220
        %p326 = scmp.lt.s32.totalorder %s25, 1
        %s327 = scalar_select %p326, %s25, 1
        %s328 = smul.addr %s327, 2
        %s329 = smul.addr %s328, 8
        %s330 = scalar_lea.vmem %s7, %s329
        %p331 = scmp.lt.s32.totalorder %s25, 1
        %s332 = scalar_select %p331, %s25, 1
        %s333 = smul.addr %s332, 4
        %s334 = scalar_lea.vmem %s0, %s333
        %p335 = scmp.lt.s32.totalorder %s25, 1
        %s336 = scalar_select %p335, %s25, 1
        %s337 = smul.addr %s336, 4
        %s338 = scalar_lea.vmem %s1, %s337
        %p339 = scmp.lt.s32.totalorder %s25, 1
        %s340 = scalar_select %p339, %s25, 1
        %s341 = smul.addr %s340, 16
        %s342 = smul.addr %s341, 8
        %s343 = scalar_lea.vmem %s2, %s342
        %p344 = scmp.lt.s32.totalorder %s25, 1
        %s345 = scalar_select %p344, %s25, 1
        %s346 = smul.addr %s345, 16
        %s347 = smul.addr %s346, 8
        %s348 = scalar_lea.vmem %s3, %s347
        %p349 = scmp.lt.s32.totalorder %s25, 1
        %s350 = scalar_select %p349, %s25, 1
        %s351 = smul.addr %s350, 2
        %s352 = smul.addr %s351, 8
        %s353 = scalar_lea.vmem %s7, %s352
        %v354 = vld [vmem:[%s343] sm:$0xff]
        %v355 = vld [vmem:[%s343 + $0x8] sm:$0xff]
        %v356 = vld [vmem:[%s343 + $0x10] sm:$0xff]
        %v357 = vld [vmem:[%s343 + $0x18] sm:$0xff]
        %v358 = vld [vmem:[%s343 + $0x20] sm:$0xff]
        %v359 = vld [vmem:[%s343 + $0x28] sm:$0xff]
        %v360 = vld [vmem:[%s343 + $0x30] sm:$0xff]
        %v361 = vld [vmem:[%s343 + $0x38] sm:$0xff]
        %v362 = vld [vmem:[%s343 + $0x40] sm:$0xff]
        %v363 = vld [vmem:[%s343 + $0x48] sm:$0xff]
        %v364 = vld [vmem:[%s343 + $0x50] sm:$0xff]
        %v365 = vld [vmem:[%s343 + $0x58] sm:$0xff]
        %v366 = vld [vmem:[%s343 + $0x60] sm:$0xff]
        %v367 = vld [vmem:[%s343 + $0x68] sm:$0xff]
        %v368 = vld [vmem:[%s343 + $0x70] sm:$0xff]
        %v369 = vld [vmem:[%s343 + $0x78] sm:$0xff]
        %370 = vxpose.xlu0.b32.start [1/16] %v354, 128
        %371 = vxpose.xlu0.b32.cont [2/16] %v355, 128
        %372 = vxpose.xlu0.b32.cont [3/16] %v356, 128
        %373 = vxpose.xlu0.b32.cont [4/16] %v357, 128
        %374 = vxpose.xlu0.b32.cont [5/16] %v358, 128
        %375 = vxpose.xlu0.b32.cont [6/16] %v359, 128
        %376 = vxpose.xlu0.b32.cont [7/16] %v360, 128
        %377 = vxpose.xlu0.b32.cont [8/16] %v361, 128
        %378 = vxpose.xlu0.b32.cont [9/16] %v362, 128
        %379 = vxpose.xlu0.b32.cont [10/16] %v363, 128
        %380 = vxpose.xlu0.b32.cont [11/16] %v364, 128
        %381 = vxpose.xlu0.b32.cont [12/16] %v365, 128
        %382 = vxpose.xlu0.b32.cont [13/16] %v366, 128
        %383 = vxpose.xlu0.b32.cont [14/16] %v367, 128
        %384 = vxpose.xlu0.b32.cont [15/16] %v368, 128
        %385 = vxpose.xlu0.b32.end [16/16] %v369, 128
        %v386 = vpop.trf.xlu0
        %v387 = vpop.trf.xlu0
        %v388 = vpop.trf.xlu0
        %v389 = vpop.trf.xlu0
        %v390 = vpop.trf.xlu0
        %v391 = vpop.trf.xlu0
        %v392 = vpop.trf.xlu0
        %v393 = vpop.trf.xlu0
        %v394 = vpop.trf.xlu0
        %v395 = vpop.trf.xlu0
        %v396 = vpop.trf.xlu0
        %v397 = vpop.trf.xlu0
        %v398 = vpop.trf.xlu0
        %v399 = vpop.trf.xlu0
        %v400 = vpop.trf.xlu0
        %v401 = vpop.trf.xlu0
        %v402 = vmax.f32 %v386, %v387
        %v403 = vrot.slane %v402, 4
        %v404 = vmax.f32 %v402, %v403
        %v405 = vrot.slane %v404, 2
        %v406 = vmax.f32 %v404, %v405
        %v407 = vrot.slane %v406, 1
        %v408 = vmax.f32 %v406, %v407
        %v409 = vsub.f32 %v386, %v408
        %v410 = vsub.f32 %v387, %v408
        %v411 = vmul.f32 %v409, 1.442695
        %v412 = vpow.pop %v411
        %v413 = vmul.f32 %v410, 1.442695
        %v414 = vpow.pop %v413
        %v415 = vadd.f32 %v412, %v414
        %v416 = vrot.slane %v415, 4
        %v417 = vadd.f32 %v415, %v416
        %v418 = vrot.slane %v417, 2
        %v419 = vadd.f32 %v417, %v418
        %v420 = vrot.slane %v419, 1
        %v421 = vadd.f32 %v419, %v420
        %v422 = vrcp.pop %v421
        %v423 = vmul.f32 %v412, %v422
        %v424 = vmul.f32 %v414, %v422
        %v425 = vld [vmem:[%s348] sm:$0xff]
        %v426 = vld [vmem:[%s348 + $0x8] sm:$0xff]
        %v427 = vld [vmem:[%s348 + $0x10] sm:$0xff]
        %v428 = vld [vmem:[%s348 + $0x18] sm:$0xff]
        %v429 = vld [vmem:[%s348 + $0x20] sm:$0xff]
        %v430 = vld [vmem:[%s348 + $0x28] sm:$0xff]
        %v431 = vld [vmem:[%s348 + $0x30] sm:$0xff]
        %v432 = vld [vmem:[%s348 + $0x38] sm:$0xff]
        %v433 = vld [vmem:[%s348 + $0x40] sm:$0xff]
        %v434 = vld [vmem:[%s348 + $0x48] sm:$0xff]
        %v435 = vld [vmem:[%s348 + $0x50] sm:$0xff]
        %v436 = vld [vmem:[%s348 + $0x58] sm:$0xff]
        %v437 = vld [vmem:[%s348 + $0x60] sm:$0xff]
        %v438 = vld [vmem:[%s348 + $0x68] sm:$0xff]
        %v439 = vld [vmem:[%s348 + $0x70] sm:$0xff]
        %v440 = vld [vmem:[%s348 + $0x78] sm:$0xff]
        %441 = vxpose.xlu0.b32.start [1/16] %v425, 128
        %442 = vxpose.xlu0.b32.cont [2/16] %v426, 128
        %443 = vxpose.xlu0.b32.cont [3/16] %v427, 128
        %444 = vxpose.xlu0.b32.cont [4/16] %v428, 128
        %445 = vxpose.xlu0.b32.cont [5/16] %v429, 128
        %446 = vxpose.xlu0.b32.cont [6/16] %v430, 128
        %447 = vxpose.xlu0.b32.cont [7/16] %v431, 128
        %448 = vxpose.xlu0.b32.cont [8/16] %v432, 128
        %449 = vxpose.xlu0.b32.cont [9/16] %v433, 128
        %450 = vxpose.xlu0.b32.cont [10/16] %v434, 128
        %451 = vxpose.xlu0.b32.cont [11/16] %v435, 128
        %452 = vxpose.xlu0.b32.cont [12/16] %v436, 128
        %453 = vxpose.xlu0.b32.cont [13/16] %v437, 128
        %454 = vxpose.xlu0.b32.cont [14/16] %v438, 128
        %455 = vxpose.xlu0.b32.cont [15/16] %v439, 128
        %456 = vxpose.xlu0.b32.end [16/16] %v440, 128
        %v457 = vpop.trf.xlu0
        %v458 = vpop.trf.xlu0
        %v459 = vpop.trf.xlu0
        %v460 = vpop.trf.xlu0
        %v461 = vpop.trf.xlu0
        %v462 = vpop.trf.xlu0
        %v463 = vpop.trf.xlu0
        %v464 = vpop.trf.xlu0
        %v465 = vpop.trf.xlu0
        %v466 = vpop.trf.xlu0
        %v467 = vpop.trf.xlu0
        %v468 = vpop.trf.xlu0
        %v469 = vpop.trf.xlu0
        %v470 = vpop.trf.xlu0
        %v471 = vpop.trf.xlu0
        %v472 = vpop.trf.xlu0
        %v473 = vmax.f32 %v457, %v458
        %v474 = vrot.slane %v473, 4
        %v475 = vmax.f32 %v473, %v474
        %v476 = vrot.slane %v475, 2
        %v477 = vmax.f32 %v475, %v476
        %v478 = vrot.slane %v477, 1
        %v479 = vmax.f32 %v477, %v478
        %v480 = vsub.f32 %v457, %v479
        %v481 = vsub.f32 %v458, %v479
        %v482 = vmul.f32 %v480, 1.442695
        %v483 = vpow.pop %v482
        %v484 = vmul.f32 %v481, 1.442695
        %v485 = vpow.pop %v484
        %v486 = vadd.f32 %v483, %v485
        %v487 = vrot.slane %v486, 4
        %v488 = vadd.f32 %v486, %v487
        %v489 = vrot.slane %v488, 2
        %v490 = vadd.f32 %v488, %v489
        %v491 = vrot.slane %v490, 1
        %v492 = vadd.f32 %v490, %v491
        %v493 = vrcp.pop %v492
        %v494 = vmul.f32 %v483, %v493
        %v495 = vmul.f32 %v485, %v493
        %496 = vst [vmem:[%s316] sm:$0xff] %v423
        %497 = vst [vmem:[%s316 + $0x10] sm:$0xff] %v424
        %498 = vst [vmem:[%s316 + $0x8] sm:$0xff] %v494
        %499 = vst [vmem:[%s316 + $0x18] sm:$0xff] %v495
        %500 = vmax.xlane.f32.xlu0 %v423
        %v501 = vpop.xlane.xlu0 %500
        %502 = vmax.xlane.f32.xlu0 %v424
        %v503 = vpop.xlane.xlu0 %502
        %vm504 = vcmask 7168
        %505 = vst.msk [vmem:[%s353] sm:$0xff] %vm504, %v501
        %506 = vst.msk [vmem:[%s353 + $0x8] sm:$0xff] %vm504, %v503
        %v507 = vld [vmem:[%s4] sm:$0xf]
        %v508 = vld [vmem:[%s334] sm:$0xf]
        %v509 = vmul.f32 %v508, 0.1
        %v511 = vrot.slane %v507, 2
        %v513 = vmul.f32 %v509, %v511
        %v514 = vadd.f32 %v507, %v513
        %v515 = vmul.f32 %v508, 0.2
        %v516 = vmul.f32 %v515, 1.442695
        %v517 = vpow.pop %v516
        %v518 = vmul.f32 %v507, %v517
        %v519 = vmul.f32 %v518, 0.5
        %v521 = vrot.slane %v519, 2
        %v523 = vsub.f32 %v514, %v521
        %v525 = vrot.slane %v518, 2
        %v527 = vadd.f32 %v523, %v525
        %v529 = vrot.slane %v527, 6
        %vm531 = vcmask 1041408
        %v532 = vsel %vm531, %v523, %v529
        %533 = vst [vmem:[%s323] sm:$0xf] %v532
        %v534 = vld [vmem:[%s338] sm:$0xf]
        %v535 = vmul.f32 %v534, 0.1
        %v536 = vmul.f32 %v535, %v511
        %v537 = vadd.f32 %v507, %v536
        %v538 = vmul.f32 %v534, 0.2
        %v539 = vmul.f32 %v538, 1.442695
        %v540 = vpow.pop %v539
        %v541 = vmul.f32 %v507, %v540
        %v542 = vmul.f32 %v541, 0.5
        %v544 = vrot.slane %v542, 2
        %v546 = vsub.f32 %v537, %v544
        %v548 = vrot.slane %v541, 2
        %v550 = vadd.f32 %v546, %v548
        %v552 = vrot.slane %v550, 6
        %v554 = vsel %vm531, %v546, %v552
        %v555 = vsub.f32 1.0, %v554
        %v556 = vsub.f32 1.0, %v555
        %v558 = vrot.slane %v555, 2
        %vm560 = vcmask 1040384
        %v561 = vsel %vm560, %v558, %v554
        %v562 = vsel %vm531, %v561, %v556
        %vm563 = vcmask 1042432
        %v564 = vsel %vm563, %v562, %v554
        %565 = vst [vmem:[%s323 + $0x4] sm:$0xf] %v564
        %s566 = sand.u32 %s158, 1
        %s567 = scalar_lea.sflag [#allocation3], %s566
        %s568 = sand.u32 %s158, 1
        %s569 = smul.addr %s568, 32
        %s570 = scalar_lea.vmem [#allocation2], %s569
        %s571 = sand.u32 %s184, 1
        %s572 = scalar_lea.sflag [#allocation5], %s571
        %s573 = sand.u32 %s184, 1
        %s574 = smul.addr %s573, 8
        %s575 = scalar_lea.vmem [#allocation4], %s574
        %p576 = scmp.lt.s32.totalorder %s25, 1
        %s577 = scalar_select %p576, %s25, 1
        %s578 = smul.addr %s577, 2
        %s579 = smul.addr %s578, 8
        %s580 = scalar_lea.vmem %s7, %s579
        // Predicated region
        $region41: #{tpu_custom_call.1} parent=39 // pred_check
          %p581 = pneg %p168
        $region42: #{tpu_custom_call.1} parent=39 // pred_check_branch
          %583 = sbr.rel (%p581) target = $region44
        $region43: #{tpu_custom_call.1} parent=39 // pred_region
          %s585 = ssub.s32 512, 512
          %586 = vsyncadd %s567, %s585
          %s587 = smul.addr %s25, 4
          %s588 = smul.addr %s587, 128
          %s589 = scalar_lea.hbm %s5, %s588
          %s590 = sshll.u32 %s570, 4
          %s591 = int_to_ptr.vmem [resolvable:$true] %s590
          %596 = dma.vmem_to_hbm [thread:$0]  %s591, 512, %s589, %s567, 256, 256, 16
        $region44: #{tpu_custom_call.1} parent=39 // pred_fallthru
          _
        // Predicated region
        $region45: #{tpu_custom_call.1} parent=39 // pred_check
          %p597 = pneg %p194
        $region46: #{tpu_custom_call.1} parent=39 // pred_check_branch
          %599 = sbr.rel (%p597) target = $region48
        $region47: #{tpu_custom_call.1} parent=39 // pred_region
          %s601 = ssub.s32 128, 128
          %602 = vsyncadd %s572, %s601
          %s603 = smul.addr %s25, 2
          %s604 = smul.addr %s603, 64
          %s605 = scalar_lea.hbm %s6, %s604
          %s607 = sshll.u32 %s575, 4
          %s608 = int_to_ptr.vmem [resolvable:$true] %s607
          %610 = dma.vmem_to_hbm [thread:$0]  %s608, 128, %s605, %s572
        $region48: #{tpu_custom_call.1} parent=39 // pred_fallthru
          _
        // Predicated region
        $region49: #{tpu_custom_call.1} parent=39 // pred_check
          %p611 = pneg %p220
        $region50: #{tpu_custom_call.1} parent=39 // pred_check_branch
          %613 = sbr.rel (%p611) target = $region52
        $region51: #{tpu_custom_call.1} parent=39 // pred_region
          _
        $region52: #{tpu_custom_call.1} parent=39 // pred_fallthru
          _
      $region40: #{tpu_custom_call.1} parent=5 // pred_fallthru
        _
      %p614 = scmp.le.s32.totalorder 2, %s20
      // Predicated region
      $region53: #{tpu_custom_call.1} parent=5 // pred_check
        %p615 = pneg %p614
      $region54: #{tpu_custom_call.1} parent=5 // pred_check_branch
        %617 = sbr.rel (%p615) target = $region56
      $region55: #{tpu_custom_call.1} parent=5 // pred_region
        %s618 = ssub.s32 %s20, 2
        // Predicated region
        $region57: #{tpu_custom_call.1} parent=55 // pred_check
          %p619 = pneg %p174
        $region58: #{tpu_custom_call.1} parent=55 // pred_check_branch
          %621 = sbr.rel (%p619) target = $region60
        $region59: #{tpu_custom_call.1} parent=55 // pred_region
          %s622 = sand.u32 %s159, 1
          %s623 = scalar_lea.sflag [#allocation3], %s622
          %s624 = sand.u32 %s159, 1
          %s625 = smul.addr %s624, 32
          %s626 = scalar_lea.vmem [#allocation2], %s625
          %627 = dma.done %s623, 512
        $region60: #{tpu_custom_call.1} parent=55 // pred_fallthru
          _
        // Predicated region
        $region61: #{tpu_custom_call.1} parent=55 // pred_check
          %p628 = pneg %p200
        $region62: #{tpu_custom_call.1} parent=55 // pred_check_branch
          %630 = sbr.rel (%p628) target = $region64
        $region63: #{tpu_custom_call.1} parent=55 // pred_region
          %s631 = sand.u32 %s185, 1
          %s632 = scalar_lea.sflag [#allocation5], %s631
          %s633 = sand.u32 %s185, 1
          %s634 = smul.addr %s633, 8
          %s635 = scalar_lea.vmem [#allocation4], %s634
          %636 = dma.done %s632, 128
        $region64: #{tpu_custom_call.1} parent=55 // pred_fallthru
          _
        // Predicated region
        $region65: #{tpu_custom_call.1} parent=55 // pred_check
          %p637 = pneg %p226
        $region66: #{tpu_custom_call.1} parent=55 // pred_check_branch
          %639 = sbr.rel (%p637) target = $region68
        $region67: #{tpu_custom_call.1} parent=55 // pred_region
          %p640 = scmp.lt.s32.totalorder %s26, 1
          %s641 = scalar_select %p640, %s26, 1
          %s642 = smul.addr %s641, 2
          %s643 = smul.addr %s642, 8
          %s644 = scalar_lea.vmem %s7, %s643
        $region68: #{tpu_custom_call.1} parent=55 // pred_fallthru
          _
      $region56: #{tpu_custom_call.1} parent=5 // pred_fallthru
        _
    $region6: #{tpu_custom_call.1} parent=1 // loop_footer
      %s24 = sadd.s32 1, %s20
    $region7: #{tpu_custom_call.1} parent=1 // loop_footer_branch
      %19 = sbr.rel target = $region3
    $region8: #{tpu_custom_call.1} parent=1 // loop_exit
      _
    %645 = vsyncpa [#allocation3], 1
    %s646 = scalar_lea.sflag [#allocation3], 1
    %647 = vsyncpa %s646, 1
    %648 = vsyncpa [#allocation5], 1
    %s649 = scalar_lea.sflag [#allocation5], 1
    %650 = vsyncpa %s649, 1

</llo_original>
